<compile_context>
chip_gen: v5e
topology: v5e:2x2
jax: 0.10.0
libtpu: 0.0.40
codegen_flags: <defaults>
</compile_context>

<pallas_src>
import functools

import jax
import jax.numpy as jnp
import numpy as np
from jax.experimental import pallas as pl
from jax.experimental.pallas import tpu as pltpu


def _round_up(x, m):
    return (x + m - 1) // m * m


def _num_tensorcores_per_chip():
    """Best-effort TC count: 2 on v7x, 1 on v5e/v6e.  Conservative fallback 1."""
    try:
        kind = jax.devices()[0].device_kind.lower()
    except Exception:
        return 1
    return 2 if "7" in kind else 1


def _conv_fused_kernel(x_ref, w_ref, b_ref, o_ref, *, q_tile, win, shifts):
    """One lane-dense tile of the folded (batch+spatial) output per grid step.

    x_ref: (C_in, L_in)          flattened circular-padded input (bf16), resident
    w_ref: (C_out, K*K*C_in)     pre-flattened weights (bf16), resident
    b_ref: (C_out, 1)            bias (f32), resident
    o_ref: (C_out, q_tile)       output tile; q_tile is a multiple of 128
    """
    q0 = pl.multiple_of(pl.program_id(0) * q_tile, 128)
    # One aligned window load per tile; the K*K shifted views are static
    # in-register slices generated once and stacked into a single GEMM operand.
    xwin = x_ref[:, pl.ds(q0, win)]                           # (C_in, win) bf16
    xstk = jnp.concatenate([xwin[:, s:s + q_tile] for s in shifts],
                           axis=0)                            # (K*K*C_in, q_tile)
    acc = jnp.dot(w_ref[...], xstk,
                  preferred_element_type=jnp.float32)         # single MXU GEMM
    o_ref[...] = (acc + b_ref[...]).astype(o_ref.dtype)


def conv2d_circular_pallas(x, weight, bias, *, stride=1, padding=1):
    """nn.Conv2d forward with padding_mode='circular' (NCHW input, OIHW weight).

    Strides > 1 are handled exactly by computing the stride-1 result and
    subsampling in the wrapper (only stride=1 is exercised by Conv2dWrap here).
    """
    n, c_in, h, w = x.shape
    c_out, _, kh, kw = weight.shape
    hp, wp = h + 2 * padding, w + 2 * padding
    h_out = (hp - kh) // stride + 1
    w_out = (wp - kw) // stride + 1

    # --- glue: bf16 cast -> circular pad -> flatten -> ONE trailing pad ------
    xb = x.astype(jnp.bfloat16)
    xp = jnp.pad(xb, ((0, 0), (0, 0), (padding, padding), (padding, padding)),
                 mode="wrap")                                   # (N, C_in, Hp, Wp)
    q_valid = n * hp * wp
    q_total = _round_up(q_valid, 128)                           # lane-dense grid axis
    max_shift = (kh - 1) * wp + (kw - 1)
    slack = _round_up(max(max_shift, 1), 128)                   # tap read-ahead
    l_in = q_total + slack
    xf = jnp.transpose(xp, (1, 0, 2, 3)).reshape(c_in, q_valid)
    xflat = jnp.pad(xf, ((0, 0), (0, l_in - q_valid)))          # (C_in, L_in) bf16

    # Pre-flattened weight: row co, column (dy*kw + dx)*c_in + ci  (matches the
    # kernel's concat order of shifted slices).
    w_flat = jnp.transpose(weight, (0, 2, 3, 1)) \
                .reshape(c_out, kh * kw * c_in).astype(jnp.bfloat16)
    b2d = bias.reshape(c_out, 1).astype(jnp.float32)

    # Chip-aware tile choice: largest 128-multiple tile dividing q_total,
    # capped at 1024 lanes; require >= 2 grid steps only when 2 TensorCores
    # exist (v7x) so both get a "parallel" step; single step on v5e/v6e.
    n_tc = _num_tensorcores_per_chip()
    cap = 1024
    q_tile = 128
    cand = 128
    while cand <= min(q_total, cap):
        if q_total % cand == 0:
            steps = q_total // cand
            if n_tc == 1 or steps >= 2 or q_total <= 128:
                q_tile = cand
        cand += 128
    win = q_tile + slack
    shifts = tuple(dy * wp + dx for dy in range(kh) for dx in range(kw))

    kernel = functools.partial(_conv_fused_kernel, q_tile=q_tile, win=win,
                               shifts=shifts)

    out_flat = pl.pallas_call(
        kernel,
        out_shape=jax.ShapeDtypeStruct((c_out, q_total), x.dtype),
        grid_spec=pltpu.PrefetchScalarGridSpec(
            num_scalar_prefetch=0,
            grid=(q_total // q_tile,),
            in_specs=[
                pl.BlockSpec((c_in, l_in), lambda i: (0, 0)),          # resident x
                pl.BlockSpec((c_out, kh * kw * c_in), lambda i: (0, 0)),
                pl.BlockSpec((c_out, 1), lambda i: (0, 0)),
            ],
            out_specs=pl.BlockSpec((c_out, q_tile), lambda i: (0, i)),
        ),
        compiler_params=pltpu.CompilerParams(
            dimension_semantics=("parallel",)),
    )(xflat, w_flat, b2d)

    # --- glue: gather valid (and strided) output positions -------------------
    v = out_flat[:, :q_valid].reshape(c_out, n, hp, wp)
    v = v[:, :, :(h_out - 1) * stride + 1:stride,
             :(w_out - 1) * stride + 1:stride]
    return jnp.transpose(v, (1, 0, 2, 3))                       # (N, C_out, Ho, Wo)


if __name__ == "__main__":
    # Conv2dWrap wraps nn.Conv2d(4, 8, kernel_size=3, stride=1, padding=1)
    # with padding_mode forced to 'circular'.
    N, C_IN, H, W = 2, 4, 16, 16
    C_OUT, K, STRIDE, PAD = 8, 3, 1, 1

    key = jax.random.PRNGKey(0)
    kx, kw_, kb = jax.random.split(key, 3)

    x = jax.random.normal(kx, (N, C_IN, H, W), dtype=jnp.float32)
    bound = 1.0 / float(np.sqrt(C_IN * K * K))
    weight = jax.random.uniform(kw_, (C_OUT, C_IN, K, K), jnp.float32,
                                minval=-bound, maxval=bound)
    bias = jax.random.uniform(kb, (C_OUT,), jnp.float32,
                              minval=-bound, maxval=bound)

    out = conv2d_circular_pallas(x, weight, bias, stride=STRIDE, padding=PAD)
    out = jax.block_until_ready(out)
    assert out.shape == (N, C_OUT, H, W)

    # Reference: same bf16 rounding of operands as the kernel's MXU inputs,
    # f32 accumulation (circular pad + VALID conv).  Output stays f32 (x.dtype).
    xr = x.astype(jnp.bfloat16).astype(jnp.float32)
    wr = weight.astype(jnp.bfloat16).astype(jnp.float32)
    xp_ref = jnp.pad(xr, ((0, 0), (0, 0), (PAD, PAD), (PAD, PAD)), mode="wrap")
    ref = jax.lax.conv_general_dilated(
        xp_ref, wr, window_strides=(STRIDE, STRIDE), padding="VALID",
        dimension_numbers=("NCHW", "OIHW", "NCHW"),
        precision=jax.lax.Precision.HIGHEST) + bias[None, :, None, None]

    np.testing.assert_allclose(np.asarray(out), np.asarray(ref),
                               rtol=5e-3, atol=5e-3)
    print("KERNEL_OK")
</pallas_src>

<mosaic_0001>
module attributes {stable_mosaic.version = 11 : i64} {
  func.func @_conv_fused_kernel(%arg0: i32, %arg1: memref<4x896xbf16, #tpu.memory_space<vmem>>, %arg2: memref<8x36xbf16, #tpu.memory_space<vmem>>, %arg3: memref<8x1xf32, #tpu.memory_space<vmem>>, %arg4: memref<8x768xf32, #tpu.memory_space<vmem>>) attributes {dimension_semantics = [#tpu.dimension_semantics<parallel>], iteration_bounds = array<i64: 1>, scalar_prefetch = 0 : i64, scratch_operands = 0 : i64, tpu.core_type = #tpu.core_type<tc>, window_params = [{pipeline_mode = #tpu.pipeline_mode<synchronous>, transform_indices = @transform_0, window_bounds = array<i64: 4, 896>}, {pipeline_mode = #tpu.pipeline_mode<synchronous>, transform_indices = @transform_1, window_bounds = array<i64: 8, 36>}, {pipeline_mode = #tpu.pipeline_mode<synchronous>, transform_indices = @transform_2, window_bounds = array<i64: 8, 1>}, {transform_indices = @transform_3, window_bounds = array<i64: 8, 768>}]} {
    %c768_i32 = arith.constant 768 : i32
    %0 = arith.muli %arg0, %c768_i32 : i32
    %1 = tpu.assume_multiple %0, 128 : i32
    %c0 = arith.constant 0 : index
    %2 = arith.index_cast %1 : i32 to index
    %3 = vector.load %arg1[%c0, %2] : memref<4x896xbf16, #tpu.memory_space<vmem>>, vector<4x896xbf16>
    %4 = vector.extract_strided_slice %3 {offsets = [0, 0], sizes = [4, 768], strides = [1, 1]} : vector<4x896xbf16> to vector<4x768xbf16>
    %5 = vector.extract_strided_slice %3 {offsets = [0, 1], sizes = [4, 768], strides = [1, 1]} : vector<4x896xbf16> to vector<4x768xbf16>
    %6 = vector.extract_strided_slice %3 {offsets = [0, 2], sizes = [4, 768], strides = [1, 1]} : vector<4x896xbf16> to vector<4x768xbf16>
    %7 = vector.extract_strided_slice %3 {offsets = [0, 18], sizes = [4, 768], strides = [1, 1]} : vector<4x896xbf16> to vector<4x768xbf16>
    %8 = vector.extract_strided_slice %3 {offsets = [0, 19], sizes = [4, 768], strides = [1, 1]} : vector<4x896xbf16> to vector<4x768xbf16>
    %9 = vector.extract_strided_slice %3 {offsets = [0, 20], sizes = [4, 768], strides = [1, 1]} : vector<4x896xbf16> to vector<4x768xbf16>
    %10 = vector.extract_strided_slice %3 {offsets = [0, 36], sizes = [4, 768], strides = [1, 1]} : vector<4x896xbf16> to vector<4x768xbf16>
    %11 = vector.extract_strided_slice %3 {offsets = [0, 37], sizes = [4, 768], strides = [1, 1]} : vector<4x896xbf16> to vector<4x768xbf16>
    %12 = vector.extract_strided_slice %3 {offsets = [0, 38], sizes = [4, 768], strides = [1, 1]} : vector<4x896xbf16> to vector<4x768xbf16>
    %13 = tpu.concatenate %4, %5, %6, %7, %8, %9, %10, %11, %12 in 0 : vector<4x768xbf16>, vector<4x768xbf16>, vector<4x768xbf16>, vector<4x768xbf16>, vector<4x768xbf16>, vector<4x768xbf16>, vector<4x768xbf16>, vector<4x768xbf16>, vector<4x768xbf16> -> vector<36x768xbf16>
    %c0_0 = arith.constant 0 : index
    %c0_1 = arith.constant 0 : index
    %14 = vector.load %arg2[%c0_0, %c0_1] : memref<8x36xbf16, #tpu.memory_space<vmem>>, vector<8x36xbf16>
    %cst = arith.constant dense<0.000000e+00> : vector<8x768xf32>
    %15 = tpu.matmul %14, %13, %cst {dimension_numbers = #tpu.dot_dimension_numbers<[1], [0], [0], [1], [0, 0, 1, 1], [], []>} : vector<8x36xbf16>, vector<36x768xbf16>, vector<8x768xf32> -> vector<8x768xf32>
    %c0_2 = arith.constant 0 : index
    %c0_3 = arith.constant 0 : index
    %16 = vector.load %arg3[%c0_2, %c0_3] : memref<8x1xf32, #tpu.memory_space<vmem>>, vector<8x1xf32>
    %17 = vector.broadcast %16 : vector<8x1xf32> to vector<8x768xf32>
    %18 = arith.addf %15, %17 : vector<8x768xf32>
    %c0_4 = arith.constant 0 : index
    %c0_5 = arith.constant 0 : index
    %19 = vector.load %arg4[%c0_4, %c0_5] : memref<8x768xf32, #tpu.memory_space<vmem>>, vector<8x768xf32>
    tpu.vector_store %arg4[%c0_4, %c0_5], %18 {strides = array<i32>} : memref<8x768xf32, #tpu.memory_space<vmem>>, vector<8x768xf32>,
    return
  }
  func.func @transform_0(%arg0: i32) -> (i32, i32) {
    %c0_i32 = arith.constant 0 : i32
    %c0_i32_0 = arith.constant 0 : i32
    %c0_i32_1 = arith.constant 0 : i32
    return %c0_i32, %c0_i32_0 : i32, i32
  }
  func.func @transform_1(%arg0: i32) -> (i32, i32) {
    %c0_i32 = arith.constant 0 : i32
    %c0_i32_0 = arith.constant 0 : i32
    %c0_i32_1 = arith.constant 0 : i32
    return %c0_i32, %c0_i32_0 : i32, i32
  }
  func.func @transform_2(%arg0: i32) -> (i32, i32) {
    %c0_i32 = arith.constant 0 : i32
    %c0_i32_0 = arith.constant 0 : i32
    %c0_i32_1 = arith.constant 0 : i32
    return %c0_i32, %c0_i32_0 : i32, i32
  }
  func.func @transform_3(%arg0: i32) -> (i32, i32) {
    %c0_i32 = arith.constant 0 : i32
    %c0_i32_0 = arith.constant 0 : i32
    return %c0_i32, %arg0 : i32, i32
  }
}

</mosaic_0001>

<llo_original>
// kernel: tpu_custom_call.1
$region0: #{tpu_custom_call.1}
  #allocation0 [shape = 'u32[]', space=smem, size = 0x4, offset = 0x4, fixed_abs, tag = 'smem constant byte address 0x4 - core index']
  #allocation1 [shape = 'u32[72,128]{1,0:T(1,128)}', space=vmem, size = 0x9000, scoped, tag = 'internal scratch']
  %s0 = inlined_call_operand.hbm [shape: bf16[4,896], index: 0, kind: input, shape index: {}]
  %s1 = inlined_call_operand.vmem [shape: bf16[8,36], index: 1, kind: input, shape index: {}]
  %s2 = inlined_call_operand.vmem [shape: f32[8,1], index: 2, kind: input, shape index: {}]
  %s3 = inlined_call_operand.hbm [shape: f32[8,768], index: 3, kind: output, shape index: {}]
  %s4 = sld [smem:[#allocation0]]
  $region26: #{tpu_custom_call.1} parent=0
    _
  %s6 = ssub.s32 1, %s4
  %s7 = scalar_select 0, %s6, %s4
  $region1: #{tpu_custom_call.1} parent=0
    #allocation2 [shape = 'u8[7168]{0}', space=vmem, size = 0x1c00, scoped, tag = 'input window, operand 0, single buffered']
    #allocation3 [shape = 's32[1]{0}', space=sflag, size = 0x4, scoped, tag = 'scoped memory for tpu_custom_call.1']
    #allocation4 [shape = 's32[1]{0}', space=sflag, size = 0x4, scoped, tag = 'scoped memory for tpu_custom_call.1']
    #allocation5 [shape = 'u8[24576]{0}', space=vmem, size = 0x6000, scoped, tag = 'output window, operand 0, single buffered']
    %8 = vsyncpa [#allocation3], 0
    %9 = vsyncpa [#allocation4], 0
    // Predicated region
    $region2: #{tpu_custom_call.1} parent=1 // pred_check
      _
    $region3: #{tpu_custom_call.1} parent=1 // pred_check_branch
      %11 = sbr.rel (0) target = $region5
    $region4: #{tpu_custom_call.1} parent=1 // pred_region
      %13 = vsyncadd [#allocation3], 0
      %s15 = sshll.u32 %s0, 4
      %s16 = int_to_ptr.hbm [resolvable:$true] %s15
      %s17 = sshll.u32 [#allocation2], 4
      %s18 = int_to_ptr.vmem [resolvable:$true] %s17
      %20 = dma.hbm_to_vmem [thread:$0]  %s16, 224, %s18, [#allocation3]
    $region5: #{tpu_custom_call.1} parent=1 // pred_fallthru
      _
    // Predicated region
    $region6: #{tpu_custom_call.1} parent=1 // pred_check
      _
    $region7: #{tpu_custom_call.1} parent=1 // pred_check_branch
      %22 = sbr.rel (0) target = $region9
    $region8: #{tpu_custom_call.1} parent=1 // pred_region
      _
    $region9: #{tpu_custom_call.1} parent=1 // pred_fallthru
      _
    // Predicated region
    $region10: #{tpu_custom_call.1} parent=1 // pred_check
      _
    $region11: #{tpu_custom_call.1} parent=1 // pred_check_branch
      %24 = sbr.rel (0) target = $region13
    $region12: #{tpu_custom_call.1} parent=1 // pred_region
      _
    $region13: #{tpu_custom_call.1} parent=1 // pred_fallthru
      _
    // Predicated region
    $region14: #{tpu_custom_call.1} parent=1 // pred_check
      _
    $region15: #{tpu_custom_call.1} parent=1 // pred_check_branch
      %26 = sbr.rel (0) target = $region17
    $region16: #{tpu_custom_call.1} parent=1 // pred_region
      %28 = dma.done [#allocation3], 224
    $region17: #{tpu_custom_call.1} parent=1 // pred_fallthru
      _
    %s30 = smul.u32 0, 768
    %s31 = sshra.s32 %s30, 7
    %s32 = sand.u32 %s30, 127
    %s33 = smul.addr %s31, 2
    %s34 = scalar_lea.vmem [#allocation2], %s33
    %v35 = vld [vmem:[%s34] sm:$0xff]
    %v36 = vld [vmem:[%s34 + $0x8] sm:$0x3f]
    %38 = vst [vmem:[#allocation1] ss:$4 sm:$0xff] %v35
    %s40 = scalar_lea.vmem [#allocation1], 32
    %41 = vst [vmem:[%s40] ss:$4 sm:$0xff] %v36
    %v42 = vld.sshfl [vmem:[#allocation1] sm:$0xff pattern:$0x73625140]
    %v43 = vld.sshfl [vmem:[#allocation1 + $0x8] sm:$0xff pattern:$0x73625140]
    %v44 = vld.sshfl [vmem:[#allocation1 + $0x10] sm:$0xff pattern:$0x73625140]
    %v45 = vld.sshfl [vmem:[#allocation1 + $0x18] sm:$0xff pattern:$0x73625140]
    %v46 = vld.sshfl [vmem:[#allocation1 + $0x20] sm:$0xff pattern:$0x73625140]
    %v47 = vld.sshfl [vmem:[#allocation1 + $0x28] sm:$0xff pattern:$0x73625140]
    %s48 = scalar_lea.vmem [#allocation1], 1
    %49 = vst [vmem:[%s48] ss:$4 sm:$0xff] %v35
    %s50 = scalar_lea.vmem [#allocation1], 33
    %51 = vst [vmem:[%s50] ss:$4 sm:$0xff] %v36
    %v52 = vld.sshfl [vmem:[#allocation1] sm:$0xff pattern:$0x73625140]
    %v54 = vld.sshfl [vmem:[#allocation1 + $0x8] sm:$0xff pattern:$0x73625140]
    %v56 = vld.sshfl [vmem:[#allocation1 + $0x10] sm:$0xff pattern:$0x73625140]
    %v58 = vld.sshfl [vmem:[#allocation1 + $0x18] sm:$0xff pattern:$0x73625140]
    %v60 = vld.sshfl [vmem:[#allocation1 + $0x20] sm:$0xff pattern:$0x73625140]
    %v62 = vld.sshfl [vmem:[#allocation1 + $0x28] sm:$0xff pattern:$0x73625140]
    %v64 = vld.sshfl [vmem:[#allocation1 + $0x30] sm:$0xff pattern:$0x73625140]
    %66 = vrot.lane.b32.xlu0 %v52, 127
    %v67 = vpop.permute.xlu0 %66
    %68 = vrot.lane.b32.xlu0 %v54, 127
    %v69 = vpop.permute.xlu0 %68
    %70 = vrot.lane.b32.xlu0 %v56, 127
    %v71 = vpop.permute.xlu0 %70
    %72 = vrot.lane.b32.xlu0 %v58, 127
    %v73 = vpop.permute.xlu0 %72
    %74 = vrot.lane.b32.xlu0 %v60, 127
    %v75 = vpop.permute.xlu0 %74
    %76 = vrot.lane.b32.xlu0 %v62, 127
    %v77 = vpop.permute.xlu0 %76
    %78 = vrot.lane.b32.xlu0 %v64, 127
    %v79 = vpop.permute.xlu0 %78
    %vm80 = vcmask 1039360
    %v81 = vsel %vm80, %v67, %v69
    %v82 = vsel %vm80, %v69, %v71
    %v83 = vsel %vm80, %v71, %v73
    %v84 = vsel %vm80, %v73, %v75
    %v85 = vsel %vm80, %v75, %v77
    %v86 = vsel %vm80, %v77, %v79
    %s87 = scalar_lea.vmem [#allocation1], 2
    %88 = vst [vmem:[%s87] ss:$4 sm:$0xff] %v35
    %s89 = scalar_lea.vmem [#allocation1], 34
    %90 = vst [vmem:[%s89] ss:$4 sm:$0xff] %v36
    %v91 = vld.sshfl [vmem:[#allocation1] sm:$0xff pattern:$0x73625140]
    %v93 = vld.sshfl [vmem:[#allocation1 + $0x8] sm:$0xff pattern:$0x73625140]
    %v95 = vld.sshfl [vmem:[#allocation1 + $0x10] sm:$0xff pattern:$0x73625140]
    %v97 = vld.sshfl [vmem:[#allocation1 + $0x18] sm:$0xff pattern:$0x73625140]
    %v99 = vld.sshfl [vmem:[#allocation1 + $0x20] sm:$0xff pattern:$0x73625140]
    %v101 = vld.sshfl [vmem:[#allocation1 + $0x28] sm:$0xff pattern:$0x73625140]
    %v103 = vld.sshfl [vmem:[#allocation1 + $0x30] sm:$0xff pattern:$0x73625140]
    %105 = vrot.lane.b32.xlu0 %v91, 126
    %v106 = vpop.permute.xlu0 %105
    %107 = vrot.lane.b32.xlu0 %v93, 126
    %v108 = vpop.permute.xlu0 %107
    %109 = vrot.lane.b32.xlu0 %v95, 126
    %v110 = vpop.permute.xlu0 %109
    %111 = vrot.lane.b32.xlu0 %v97, 126
    %v112 = vpop.permute.xlu0 %111
    %113 = vrot.lane.b32.xlu0 %v99, 126
    %v114 = vpop.permute.xlu0 %113
    %115 = vrot.lane.b32.xlu0 %v101, 126
    %v116 = vpop.permute.xlu0 %115
    %117 = vrot.lane.b32.xlu0 %v103, 126
    %v118 = vpop.permute.xlu0 %117
    %vm119 = vcmask 1031168
    %v120 = vsel %vm119, %v106, %v108
    %v121 = vsel %vm119, %v108, %v110
    %v122 = vsel %vm119, %v110, %v112
    %v123 = vsel %vm119, %v112, %v114
    %v124 = vsel %vm119, %v114, %v116
    %v125 = vsel %vm119, %v116, %v118
    %s126 = scalar_lea.vmem [#allocation1], 3
    %127 = vst [vmem:[%s126] ss:$4 sm:$0xff] %v35
    %s128 = scalar_lea.vmem [#allocation1], 35
    %129 = vst [vmem:[%s128] ss:$4 sm:$0xff] %v36
    %v130 = vld.sshfl [vmem:[#allocation1] sm:$0xff pattern:$0x73625140]
    %v132 = vld.sshfl [vmem:[#allocation1 + $0x8] sm:$0xff pattern:$0x73625140]
    %v134 = vld.sshfl [vmem:[#allocation1 + $0x10] sm:$0xff pattern:$0x73625140]
    %v136 = vld.sshfl [vmem:[#allocation1 + $0x18] sm:$0xff pattern:$0x73625140]
    %v138 = vld.sshfl [vmem:[#allocation1 + $0x20] sm:$0xff pattern:$0x73625140]
    %v140 = vld.sshfl [vmem:[#allocation1 + $0x28] sm:$0xff pattern:$0x73625140]
    %v142 = vld.sshfl [vmem:[#allocation1 + $0x30] sm:$0xff pattern:$0x73625140]
    %144 = vrot.lane.b32.xlu0 %v130, 110
    %v145 = vpop.permute.xlu0 %144
    %146 = vrot.lane.b32.xlu0 %v132, 110
    %v147 = vpop.permute.xlu0 %146
    %148 = vrot.lane.b32.xlu0 %v134, 110
    %v149 = vpop.permute.xlu0 %148
    %150 = vrot.lane.b32.xlu0 %v136, 110
    %v151 = vpop.permute.xlu0 %150
    %152 = vrot.lane.b32.xlu0 %v138, 110
    %v153 = vpop.permute.xlu0 %152
    %154 = vrot.lane.b32.xlu0 %v140, 110
    %v155 = vpop.permute.xlu0 %154
    %156 = vrot.lane.b32.xlu0 %v142, 110
    %v157 = vpop.permute.xlu0 %156
    %vm158 = vcmask 900096
    %v159 = vsel %vm158, %v145, %v147
    %v160 = vsel %vm158, %v147, %v149
    %v161 = vsel %vm158, %v149, %v151
    %v162 = vsel %vm158, %v151, %v153
    %v163 = vsel %vm158, %v153, %v155
    %v164 = vsel %vm158, %v155, %v157
    %165 = vst [vmem:[#allocation1] ss:$4 sm:$0xff] %v35
    %s166 = scalar_lea.vmem [#allocation1], 32
    %167 = vst [vmem:[%s166] ss:$4 sm:$0xff] %v36
    %v168 = vld.sshfl [vmem:[#allocation1] sm:$0xff pattern:$0x73625140]
    %v170 = vld.sshfl [vmem:[#allocation1 + $0x8] sm:$0xff pattern:$0x73625140]
    %v172 = vld.sshfl [vmem:[#allocation1 + $0x10] sm:$0xff pattern:$0x73625140]
    %v174 = vld.sshfl [vmem:[#allocation1 + $0x18] sm:$0xff pattern:$0x73625140]
    %v176 = vld.sshfl [vmem:[#allocation1 + $0x20] sm:$0xff pattern:$0x73625140]
    %v178 = vld.sshfl [vmem:[#allocation1 + $0x28] sm:$0xff pattern:$0x73625140]
    %v180 = vld.sshfl [vmem:[#allocation1 + $0x30] sm:$0xff pattern:$0x73625140]
    %182 = vrot.lane.b32.xlu0 %v168, 109
    %v183 = vpop.permute.xlu0 %182
    %184 = vrot.lane.b32.xlu0 %v170, 109
    %v185 = vpop.permute.xlu0 %184
    %186 = vrot.lane.b32.xlu0 %v172, 109
    %v187 = vpop.permute.xlu0 %186
    %188 = vrot.lane.b32.xlu0 %v174, 109
    %v189 = vpop.permute.xlu0 %188
    %190 = vrot.lane.b32.xlu0 %v176, 109
    %v191 = vpop.permute.xlu0 %190
    %192 = vrot.lane.b32.xlu0 %v178, 109
    %v193 = vpop.permute.xlu0 %192
    %194 = vrot.lane.b32.xlu0 %v180, 109
    %v195 = vpop.permute.xlu0 %194
    %vm196 = vcmask 891904
    %v197 = vsel %vm196, %v183, %v185
    %v198 = vsel %vm196, %v185, %v187
    %v199 = vsel %vm196, %v187, %v189
    %v200 = vsel %vm196, %v189, %v191
    %v201 = vsel %vm196, %v191, %v193
    %v202 = vsel %vm196, %v193, %v195
    %s203 = scalar_lea.vmem [#allocation1], 1
    %204 = vst [vmem:[%s203] ss:$4 sm:$0xff] %v35
    %s205 = scalar_lea.vmem [#allocation1], 33
    %206 = vst [vmem:[%s205] ss:$4 sm:$0xff] %v36
    %v207 = vld.sshfl [vmem:[#allocation1] sm:$0xff pattern:$0x73625140]
    %v209 = vld.sshfl [vmem:[#allocation1 + $0x8] sm:$0xff pattern:$0x73625140]
    %v211 = vld.sshfl [vmem:[#allocation1 + $0x10] sm:$0xff pattern:$0x73625140]
    %v213 = vld.sshfl [vmem:[#allocation1 + $0x18] sm:$0xff pattern:$0x73625140]
    %v215 = vld.sshfl [vmem:[#allocation1 + $0x20] sm:$0xff pattern:$0x73625140]
    %v217 = vld.sshfl [vmem:[#allocation1 + $0x28] sm:$0xff pattern:$0x73625140]
    %v219 = vld.sshfl [vmem:[#allocation1 + $0x30] sm:$0xff pattern:$0x73625140]
    %221 = vrot.lane.b32.xlu0 %v207, 108
    %v222 = vpop.permute.xlu0 %221
    %223 = vrot.lane.b32.xlu0 %v209, 108
    %v224 = vpop.permute.xlu0 %223
    %225 = vrot.lane.b32.xlu0 %v211, 108
    %v226 = vpop.permute.xlu0 %225
    %227 = vrot.lane.b32.xlu0 %v213, 108
    %v228 = vpop.permute.xlu0 %227
    %229 = vrot.lane.b32.xlu0 %v215, 108
    %v230 = vpop.permute.xlu0 %229
    %231 = vrot.lane.b32.xlu0 %v217, 108
    %v232 = vpop.permute.xlu0 %231
    %233 = vrot.lane.b32.xlu0 %v219, 108
    %v234 = vpop.permute.xlu0 %233
    %vm235 = vcmask 883712
    %v236 = vsel %vm235, %v222, %v224
    %v237 = vsel %vm235, %v224, %v226
    %v238 = vsel %vm235, %v226, %v228
    %v239 = vsel %vm235, %v228, %v230
    %v240 = vsel %vm235, %v230, %v232
    %v241 = vsel %vm235, %v232, %v234
    %s242 = scalar_lea.vmem [#allocation1], 2
    %243 = vst [vmem:[%s242] ss:$4 sm:$0xff] %v35
    %s244 = scalar_lea.vmem [#allocation1], 34
    %245 = vst [vmem:[%s244] ss:$4 sm:$0xff] %v36
    %v246 = vld.sshfl [vmem:[#allocation1] sm:$0xff pattern:$0x73625140]
    %v248 = vld.sshfl [vmem:[#allocation1 + $0x8] sm:$0xff pattern:$0x73625140]
    %v250 = vld.sshfl [vmem:[#allocation1 + $0x10] sm:$0xff pattern:$0x73625140]
    %v252 = vld.sshfl [vmem:[#allocation1 + $0x18] sm:$0xff pattern:$0x73625140]
    %v254 = vld.sshfl [vmem:[#allocation1 + $0x20] sm:$0xff pattern:$0x73625140]
    %v256 = vld.sshfl [vmem:[#allocation1 + $0x28] sm:$0xff pattern:$0x73625140]
    %v258 = vld.sshfl [vmem:[#allocation1 + $0x30] sm:$0xff pattern:$0x73625140]
    %260 = vrot.lane.b32.xlu0 %v246, 92
    %v261 = vpop.permute.xlu0 %260
    %262 = vrot.lane.b32.xlu0 %v248, 92
    %v263 = vpop.permute.xlu0 %262
    %264 = vrot.lane.b32.xlu0 %v250, 92
    %v265 = vpop.permute.xlu0 %264
    %266 = vrot.lane.b32.xlu0 %v252, 92
    %v267 = vpop.permute.xlu0 %266
    %268 = vrot.lane.b32.xlu0 %v254, 92
    %v269 = vpop.permute.xlu0 %268
    %270 = vrot.lane.b32.xlu0 %v256, 92
    %v271 = vpop.permute.xlu0 %270
    %272 = vrot.lane.b32.xlu0 %v258, 92
    %v273 = vpop.permute.xlu0 %272
    %vm274 = vcmask 752640
    %v275 = vsel %vm274, %v261, %v263
    %v276 = vsel %vm274, %v263, %v265
    %v277 = vsel %vm274, %v265, %v267
    %v278 = vsel %vm274, %v267, %v269
    %v279 = vsel %vm274, %v269, %v271
    %v280 = vsel %vm274, %v271, %v273
    %s281 = scalar_lea.vmem [#allocation1], 3
    %282 = vst [vmem:[%s281] ss:$4 sm:$0xff] %v35
    %s283 = scalar_lea.vmem [#allocation1], 35
    %284 = vst [vmem:[%s283] ss:$4 sm:$0xff] %v36
    %v285 = vld.sshfl [vmem:[#allocation1] sm:$0xff pattern:$0x73625140]
    %v287 = vld.sshfl [vmem:[#allocation1 + $0x8] sm:$0xff pattern:$0x73625140]
    %v289 = vld.sshfl [vmem:[#allocation1 + $0x10] sm:$0xff pattern:$0x73625140]
    %v291 = vld.sshfl [vmem:[#allocation1 + $0x18] sm:$0xff pattern:$0x73625140]
    %v293 = vld.sshfl [vmem:[#allocation1 + $0x20] sm:$0xff pattern:$0x73625140]
    %v295 = vld.sshfl [vmem:[#allocation1 + $0x28] sm:$0xff pattern:$0x73625140]
    %v297 = vld.sshfl [vmem:[#allocation1 + $0x30] sm:$0xff pattern:$0x73625140]
    %299 = vrot.lane.b32.xlu0 %v285, 91
    %v300 = vpop.permute.xlu0 %299
    %301 = vrot.lane.b32.xlu0 %v287, 91
    %v302 = vpop.permute.xlu0 %301
    %303 = vrot.lane.b32.xlu0 %v289, 91
    %v304 = vpop.permute.xlu0 %303
    %305 = vrot.lane.b32.xlu0 %v291, 91
    %v306 = vpop.permute.xlu0 %305
    %307 = vrot.lane.b32.xlu0 %v293, 91
    %v308 = vpop.permute.xlu0 %307
    %309 = vrot.lane.b32.xlu0 %v295, 91
    %v310 = vpop.permute.xlu0 %309
    %311 = vrot.lane.b32.xlu0 %v297, 91
    %v312 = vpop.permute.xlu0 %311
    %vm313 = vcmask 744448
    %v314 = vsel %vm313, %v300, %v302
    %v315 = vsel %vm313, %v302, %v304
    %v316 = vsel %vm313, %v304, %v306
    %v317 = vsel %vm313, %v306, %v308
    %v318 = vsel %vm313, %v308, %v310
    %v319 = vsel %vm313, %v310, %v312
    %320 = vst [vmem:[#allocation1] ss:$4 sm:$0xff] %v35
    %s321 = scalar_lea.vmem [#allocation1], 32
    %322 = vst [vmem:[%s321] ss:$4 sm:$0xff] %v36
    %v323 = vld.sshfl [vmem:[#allocation1] sm:$0xff pattern:$0x73625140]
    %v325 = vld.sshfl [vmem:[#allocation1 + $0x8] sm:$0xff pattern:$0x73625140]
    %v327 = vld.sshfl [vmem:[#allocation1 + $0x10] sm:$0xff pattern:$0x73625140]
    %v329 = vld.sshfl [vmem:[#allocation1 + $0x18] sm:$0xff pattern:$0x73625140]
    %v331 = vld.sshfl [vmem:[#allocation1 + $0x20] sm:$0xff pattern:$0x73625140]
    %v333 = vld.sshfl [vmem:[#allocation1 + $0x28] sm:$0xff pattern:$0x73625140]
    %v335 = vld.sshfl [vmem:[#allocation1 + $0x30] sm:$0xff pattern:$0x73625140]
    %337 = vrot.lane.b32.xlu0 %v323, 90
    %v338 = vpop.permute.xlu0 %337
    %339 = vrot.lane.b32.xlu0 %v325, 90
    %v340 = vpop.permute.xlu0 %339
    %341 = vrot.lane.b32.xlu0 %v327, 90
    %v342 = vpop.permute.xlu0 %341
    %343 = vrot.lane.b32.xlu0 %v329, 90
    %v344 = vpop.permute.xlu0 %343
    %345 = vrot.lane.b32.xlu0 %v331, 90
    %v346 = vpop.permute.xlu0 %345
    %347 = vrot.lane.b32.xlu0 %v333, 90
    %v348 = vpop.permute.xlu0 %347
    %349 = vrot.lane.b32.xlu0 %v335, 90
    %v350 = vpop.permute.xlu0 %349
    %vm351 = vcmask 736256
    %v352 = vsel %vm351, %v338, %v340
    %v353 = vsel %vm351, %v340, %v342
    %v354 = vsel %vm351, %v342, %v344
    %v355 = vsel %vm351, %v344, %v346
    %v356 = vsel %vm351, %v346, %v348
    %v357 = vsel %vm351, %v348, %v350
    %vm358 = vcmask 1041408
    %v360 = vsel %vm358, %v42, %v81
    %v362 = vsel %vm358, %v43, %v82
    %v364 = vsel %vm358, %v44, %v83
    %v366 = vsel %vm358, %v45, %v84
    %v368 = vsel %vm358, %v46, %v85
    %v370 = vsel %vm358, %v47, %v86
    %vm371 = vcmask 1043456
    %v373 = vsel %vm371, %v360, %v120
    %v375 = vsel %vm371, %v362, %v121
    %v377 = vsel %vm371, %v364, %v122
    %v379 = vsel %vm371, %v366, %v123
    %v381 = vsel %vm371, %v368, %v124
    %v383 = vsel %vm371, %v370, %v125
    %vm384 = vcmask 1045504
    %v386 = vsel %vm384, %v373, %v159
    %v389 = vsel %vm384, %v375, %v160
    %v392 = vsel %vm384, %v377, %v161
    %v395 = vsel %vm384, %v379, %v162
    %v398 = vsel %vm384, %v381, %v163
    %v401 = vsel %vm384, %v383, %v164
    %v405 = vsel %vm358, %v197, %v236
    %v408 = vsel %vm358, %v198, %v237
    %v411 = vsel %vm358, %v199, %v238
    %v414 = vsel %vm358, %v200, %v239
    %v417 = vsel %vm358, %v201, %v240
    %v420 = vsel %vm358, %v202, %v241
    %v422 = vsel %vm371, %v405, %v275
    %v424 = vsel %vm371, %v408, %v276
    %v426 = vsel %vm371, %v411, %v277
    %v428 = vsel %vm371, %v414, %v278
    %v430 = vsel %vm371, %v417, %v279
    %v432 = vsel %vm371, %v420, %v280
    %v434 = vsel %vm384, %v422, %v314
    %v437 = vsel %vm384, %v424, %v315
    %v440 = vsel %vm384, %v426, %v316
    %v443 = vsel %vm384, %v428, %v317
    %v446 = vsel %vm384, %v430, %v318
    %v449 = vsel %vm384, %v432, %v319
    %v451 = vld [vmem:[%s1] sm:$0xf]
    %v452 = vld [vmem:[%s2] sm:$0xff]
    %454 = vset.pattern.permute.xlu0 0
    %455 = vperm.xlu0 %454, %v452
    %v456 = vpop.permute.xlu0 %455
    %vm458 = vcmask 293888
    %v460 = vsel %vm458, %v451, 0
    %v463 = vsel %vm358, %v352, 0
    %v466 = vsel %vm358, %v353, 0
    %v469 = vsel %vm358, %v354, 0
    %v472 = vsel %vm358, %v355, 0
    %v475 = vsel %vm358, %v356, 0
    %v478 = vsel %vm358, %v357, 0
    %480 = vmatpush.bf16.msra.mxu0 0
    %481 = vmatpush.bf16.msra.mxu0 0
    %482 = vmatpush.bf16.msra.mxu0 0
    %483 = vmatpush.bf16.msra.mxu0 0
    %484 = vmatpush.bf16.msra.mxu0 0
    %485 = vmatpush.bf16.msra.mxu0 %v463
    %486 = vmatpush.bf16.msra.mxu0 %v434
    %487 = vmatpush.bf16.msra.mxu0 %v386
    %488 = vmatmul.bf16.gmra.mxu0 %v460
    %v489 = vpop.f32.mrf.mxu0
    %v490 = vadd.f32 %v456, %v489
    %v491 = vpop.f32.mrf.mxu0
    %492 = vdwg.mxu0
    %493 = vmatpush.bf16.msra.mxu0 0
    %494 = vmatpush.bf16.msra.mxu0 0
    %495 = vmatpush.bf16.msra.mxu0 0
    %496 = vmatpush.bf16.msra.mxu0 0
    %497 = vmatpush.bf16.msra.mxu0 0
    %498 = vmatpush.bf16.msra.mxu0 %v466
    %499 = vmatpush.bf16.msra.mxu0 %v437
    %500 = vmatpush.bf16.msra.mxu0 %v389
    %501 = vmatmul.bf16.gmra.mxu0 %v460
    %v502 = vpop.f32.mrf.mxu0
    %v503 = vadd.f32 %v456, %v502
    %v504 = vpop.f32.mrf.mxu0
    %505 = vdwg.mxu0
    %506 = vmatpush.bf16.msra.mxu0 0
    %507 = vmatpush.bf16.msra.mxu0 0
    %508 = vmatpush.bf16.msra.mxu0 0
    %509 = vmatpush.bf16.msra.mxu0 0
    %510 = vmatpush.bf16.msra.mxu0 0
    %511 = vmatpush.bf16.msra.mxu0 %v469
    %512 = vmatpush.bf16.msra.mxu0 %v440
    %513 = vmatpush.bf16.msra.mxu0 %v392
    %514 = vmatmul.bf16.gmra.mxu0 %v460
    %v515 = vpop.f32.mrf.mxu0
    %v516 = vadd.f32 %v456, %v515
    %v517 = vpop.f32.mrf.mxu0
    %518 = vdwg.mxu0
    %519 = vmatpush.bf16.msra.mxu0 0
    %520 = vmatpush.bf16.msra.mxu0 0
    %521 = vmatpush.bf16.msra.mxu0 0
    %522 = vmatpush.bf16.msra.mxu0 0
    %523 = vmatpush.bf16.msra.mxu0 0
    %524 = vmatpush.bf16.msra.mxu0 %v472
    %525 = vmatpush.bf16.msra.mxu0 %v443
    %526 = vmatpush.bf16.msra.mxu0 %v395
    %527 = vmatmul.bf16.gmra.mxu0 %v460
    %v528 = vpop.f32.mrf.mxu0
    %v529 = vadd.f32 %v456, %v528
    %v530 = vpop.f32.mrf.mxu0
    %531 = vdwg.mxu0
    %532 = vmatpush.bf16.msra.mxu0 0
    %533 = vmatpush.bf16.msra.mxu0 0
    %534 = vmatpush.bf16.msra.mxu0 0
    %535 = vmatpush.bf16.msra.mxu0 0
    %536 = vmatpush.bf16.msra.mxu0 0
    %537 = vmatpush.bf16.msra.mxu0 %v475
    %538 = vmatpush.bf16.msra.mxu0 %v446
    %539 = vmatpush.bf16.msra.mxu0 %v398
    %540 = vmatmul.bf16.gmra.mxu0 %v460
    %v541 = vpop.f32.mrf.mxu0
    %v542 = vadd.f32 %v456, %v541
    %v543 = vpop.f32.mrf.mxu0
    %544 = vdwg.mxu0
    %545 = vmatpush.bf16.msra.mxu0 0
    %546 = vmatpush.bf16.msra.mxu0 0
    %547 = vmatpush.bf16.msra.mxu0 0
    %548 = vmatpush.bf16.msra.mxu0 0
    %549 = vmatpush.bf16.msra.mxu0 0
    %550 = vmatpush.bf16.msra.mxu0 %v478
    %551 = vmatpush.bf16.msra.mxu0 %v449
    %552 = vmatpush.bf16.msra.mxu0 %v401
    %553 = vmatmul.bf16.gmra.mxu0 %v460
    %v554 = vpop.f32.mrf.mxu0
    %v555 = vadd.f32 %v456, %v554
    %v556 = vpop.f32.mrf.mxu0
    %557 = vdwg.mxu0
    %558 = vst [vmem:[#allocation5] sm:$0xff] %v490
    %559 = vst [vmem:[#allocation5 + $0x8] sm:$0xff] %v503
    %560 = vst [vmem:[#allocation5 + $0x10] sm:$0xff] %v516
    %561 = vst [vmem:[#allocation5 + $0x18] sm:$0xff] %v529
    %562 = vst [vmem:[#allocation5 + $0x20] sm:$0xff] %v542
    %563 = vst [vmem:[#allocation5 + $0x28] sm:$0xff] %v555
    // Predicated region
    $region18: #{tpu_custom_call.1} parent=1 // pred_check
      _
    $region19: #{tpu_custom_call.1} parent=1 // pred_check_branch
      %565 = sbr.rel (0) target = $region21
    $region20: #{tpu_custom_call.1} parent=1 // pred_region
      %567 = vsyncadd [#allocation4], 0
      %s569 = sshll.u32 [#allocation5], 4
      %s570 = int_to_ptr.vmem [resolvable:$true] %s569
      %s571 = sshll.u32 %s3, 4
      %s572 = int_to_ptr.hbm [resolvable:$true] %s571
      %574 = dma.vmem_to_hbm [thread:$0]  %s570, 768, %s572, [#allocation4]
    $region21: #{tpu_custom_call.1} parent=1 // pred_fallthru
      _
    // Predicated region
    $region22: #{tpu_custom_call.1} parent=1 // pred_check
      _
    $region23: #{tpu_custom_call.1} parent=1 // pred_check_branch
      %576 = sbr.rel (0) target = $region25
    $region24: #{tpu_custom_call.1} parent=1 // pred_region
      %578 = dma.done [#allocation4], 768
    $region25: #{tpu_custom_call.1} parent=1 // pred_fallthru
      _
    %579 = vsyncpa [#allocation3], 1
    %580 = vsyncpa [#allocation4], 1

</llo_original>
